<compile_context>
chip_gen: v6e
topology: v6e:2x2x1
jax: 0.10.0
libtpu: 0.0.40
codegen_flags: <defaults>
</compile_context>

<pallas_src>
import functools
import math

import jax
import jax.numpy as jnp
from jax.experimental import pallas as pl
from jax.experimental.pallas import tpu as pltpu

LOG2PI = float(math.log(2.0 * math.pi))

_X_BLOCK_BYTES = 8 * 1024 * 1024       # per-buffer budget for the x tile (x2 for double buffering)
_TARGET_STEP_BYTES = 2 * 1024 * 1024   # target bytes per grid step (amortize ~0.35us/step overhead)
_MIN_STEP_BYTES = 1 * 1024 * 1024      # floor when trading block size for >=2 parallel blocks (v7x)


def _cdiv(a, b):
    return -(-a // b)


def _round_up(x, m):
    return _cdiv(x, m) * m


def _divisors(n):
    return [d for d in range(1, n + 1) if n % d == 0]


def _logp_kernel(x_ref, logpz_ref, out_ref, acc_ref, *,
                 sign, n_elems, rows_total, r_tile, mask_rows):
    # x_ref:     (b_blk, r_tile, 128) chunk of b_blk samples (native dtype)
    # logpz_ref: (b_blk, 1, 1) incoming log p(z)
    # out_ref:   (b_blk, 1, 1) updated log p(z)
    # acc_ref:   (b_blk, 128) VMEM scratch: per-sample per-lane partial sum of x^2
    k = pl.program_id(1)

    @pl.when(k == 0)
    def _init():
        acc_ref[...] = jnp.zeros_like(acc_ref)

    xv = x_ref[...].astype(jnp.float32)                  # dense vregs
    if mask_rows:
        # Only the ragged last k block contains out-of-bounds (garbage) rows;
        # the compare is all-true elsewhere and only emitted when actually needed.
        row = jax.lax.broadcasted_iota(jnp.int32, xv.shape, 1) + k * r_tile
        xv = jnp.where(row < rows_total, xv, 0.0)
    acc_ref[...] += jnp.sum(xv * xv, axis=1)             # (b_blk, 128)

    @pl.when(k == pl.num_programs(1) - 1)
    def _finalize():
        ssq = jnp.sum(acc_ref[...], axis=-1, keepdims=True)      # (b_blk, 1)
        ssq = ssq.reshape(out_ref.shape)                          # (b_blk, 1, 1)
        # log p(x) under N(0, I) = -0.5 * (sum(x^2) + N * log(2*pi))
        out_ref[...] = logpz_ref[...] + (-0.5 * sign) * (ssq + n_elems * LOG2PI)


def _run_logp(x_nchw, logpz, sign):
    """Returns logpz + sign * sum_{chw} log N(x; 0, 1)."""
    B = x_nchw.shape[0]
    N = 1
    for d in x_nchw.shape[1:]:
        N *= int(d)

    itemsize = jnp.dtype(x_nchw.dtype).itemsize
    sub_mult = {4: 8, 2: 16, 1: 32}.get(itemsize, 8)     # sublane multiple per dtype

    # ---- lane layout: each sample viewed as (R, 128) lane-dense rows ----
    x_flat = x_nchw.reshape(B, N)                        # free reshape, native dtype
    R = _cdiv(N, 128)
    if N % 128 != 0:
        # TODO(synk): rare for Glow shapes; the lane tail could be masked in-kernel
        # (non-dividing last block) instead of this padded copy.
        x_flat = jnp.pad(x_flat, ((0, 0), (0, R * 128 - N)))
    x_3d = x_flat.reshape(B, R, 128)

    # ---- split the per-sample reduction rows into balanced K chunks ----
    per_sample_bytes = R * 128 * itemsize
    if per_sample_bytes <= _X_BLOCK_BYTES:
        r_tile = R                                       # full dim -> no sublane constraint
    else:
        cap_rows = max(sub_mult,
                       (_X_BLOCK_BYTES // (128 * itemsize)) // sub_mult * sub_mult)
        k_split = _cdiv(R, cap_rows)
        r_tile = _round_up(_cdiv(R, k_split), sub_mult)  # balanced, minimal row padding
    k_grid = _cdiv(R, r_tile)
    mask_rows = (R % r_tile) != 0                        # ragged last chunk -> in-kernel mask

    # ---- batch block: an exact divisor of B (never pad the batch) ----
    tile_bytes = r_tile * 128 * itemsize
    if k_grid > 1:
        b_blk = 1                                        # blocks already ~budget-sized
    else:
        b_blk = 1
        for d in _divisors(B):
            if d * tile_bytes <= _X_BLOCK_BYTES:
                b_blk = d
                if d * tile_bytes >= _TARGET_STEP_BYTES:
                    break
            else:
                break
        # Keep >= 2 blocks on the "parallel" axis (v7x: 2 TensorCores) when the
        # resulting blocks stay reasonably sized.
        if b_blk == B and B > 1:
            proper = [d for d in _divisors(B) if d < B]
            if proper and max(proper) * tile_bytes >= _MIN_STEP_BYTES:
                b_blk = max(proper)

    logpz_3d = logpz.reshape(B, 1, 1).astype(jnp.float32)

    kernel = functools.partial(
        _logp_kernel, sign=float(sign), n_elems=float(N),
        rows_total=R, r_tile=r_tile, mask_rows=mask_rows)

    block_bytes = b_blk * tile_bytes
    vmem_limit = int(min(48 << 20, max(32 << 20, 3 * block_bytes + (4 << 20))))

    cost = pl.CostEstimate(
        flops=2 * B * N,
        transcendentals=0,
        bytes_accessed=B * N * itemsize + 2 * B * 4)

    out = pl.pallas_call(
        kernel,
        out_shape=jax.ShapeDtypeStruct((B, 1, 1), jnp.float32),
        grid_spec=pltpu.PrefetchScalarGridSpec(
            num_scalar_prefetch=0,
            grid=(B // b_blk, k_grid),                   # reduction axis last
            in_specs=[
                pl.BlockSpec((b_blk, r_tile, 128), lambda b, k: (b, k, 0)),
                pl.BlockSpec((b_blk, 1, 1), lambda b, k: (b, 0, 0)),
            ],
            out_specs=pl.BlockSpec((b_blk, 1, 1), lambda b, k: (b, 0, 0)),
            scratch_shapes=[pltpu.VMEM((b_blk, 128), jnp.float32)],
        ),
        compiler_params=pltpu.CompilerParams(
            dimension_semantics=("parallel", "arbitrary"),
            vmem_limit_bytes=vmem_limit,
        ),
        cost_estimate=cost,
    )(x_3d, logpz_3d)
    return out.reshape(B)


class GaussianPrior:
    """JAX/Pallas port of the PyTorch GaussianPrior module.

    Standard-normal prior (mean=0, logsd=0); forward adds log p(x) per sample to
    logpz, reverse subtracts log p(z) where z = x (or z = eps, since
    sample = mean + exp(logsd)*eps = eps).
    """

    def __init__(self, input_shape):
        self.input_shape = input_shape  # (bsz, c, h, w)

    def __call__(self, x, logdet, logpz, eps=None, reverse=False):
        if not reverse:
            logpz = _run_logp(x, logpz, sign=1.0)
            return x, logdet, logpz
        else:
            bsz, c, h, w = self.input_shape
            if x is None:
                # TODO(synk): torch draws eps ~ N(0,1) in-place when eps is None;
                # stateless JAX needs an explicit PRNG key, so fall back to zeros here.
                z = eps if eps is not None else jnp.zeros((bsz, c, h, w), jnp.float32)
            else:
                z = x
            logpz = _run_logp(z, logpz, sign=-1.0)
            return z, logdet, logpz


if __name__ == "__main__":
    key = jax.random.PRNGKey(0)
    B, C, H, W = 2, 4, 16, 16
    kx, ke, kq = jax.random.split(key, 3)
    x = jax.random.normal(kx, (B, C, H, W), dtype=jnp.float32)
    logdet = jnp.zeros((B,), dtype=jnp.float32)
    logpz = jnp.zeros((B,), dtype=jnp.float32)

    prior = GaussianPrior((B, C, H, W))

    # Forward (non-reverse) path
    x_out, logdet_out, logpz_out = prior(x, logdet, logpz, eps=None, reverse=False)
    jax.block_until_ready(logpz_out)

    # Reference check in plain JAX
    ref = jnp.sum(-0.5 * (LOG2PI + x.astype(jnp.float32) ** 2), axis=(1, 2, 3))
    assert jnp.allclose(logpz_out, ref, rtol=1e-5, atol=1e-5), (logpz_out, ref)
    assert jnp.allclose(x_out, x)

    # Reverse path (sample from prior with eps)
    eps = jax.random.normal(ke, (B, C, H, W), dtype=jnp.float32)
    z, logdet_r, logpz_r = prior(None, logdet, jnp.zeros((B,), jnp.float32),
                                 eps=eps, reverse=True)
    jax.block_until_ready(logpz_r)
    ref_r = -jnp.sum(-0.5 * (LOG2PI + eps ** 2), axis=(1, 2, 3))
    assert jnp.allclose(logpz_r, ref_r, rtol=1e-5, atol=1e-5)
    assert jnp.allclose(z, eps)

    # Odd shape (N % 128 != 0, odd batch): exercises the lane-tail / divisor paths.
    B2, C2, H2, W2 = 3, 3, 10, 10
    x2 = jax.random.normal(kq, (B2, C2, H2, W2), dtype=jnp.float32)
    prior2 = GaussianPrior((B2, C2, H2, W2))
    _, _, logpz2 = prior2(x2, jnp.zeros((B2,), jnp.float32),
                          jnp.zeros((B2,), jnp.float32), eps=None, reverse=False)
    jax.block_until_ready(logpz2)
    ref2 = jnp.sum(-0.5 * (LOG2PI + x2 ** 2), axis=(1, 2, 3))
    assert jnp.allclose(logpz2, ref2, rtol=1e-5, atol=1e-5), (logpz2, ref2)

    print("KERNEL_OK")
</pallas_src>

<mosaic_0001>
module attributes {stable_mosaic.version = 11 : i64} {
  func.func @_logp_kernel(%arg0: i32, %arg1: i32, %arg2: memref<2x8x128xf32, #tpu.memory_space<vmem>>, %arg3: memref<2x1x1xf32, #tpu.memory_space<vmem>>, %arg4: memref<2x1x1xf32, #tpu.memory_space<vmem>>, %arg5: memref<2x128xf32, #tpu.memory_space<vmem>>) attributes {dimension_semantics = [#tpu.dimension_semantics<parallel>, #tpu.dimension_semantics<arbitrary>], iteration_bounds = array<i64: 1, 1>, scalar_prefetch = 0 : i64, scratch_operands = 1 : i64, tpu.core_type = #tpu.core_type<tc>, window_params = [{transform_indices = @transform_0, window_bounds = array<i64: 2, 8, 128>}, {transform_indices = @transform_1, window_bounds = array<i64: 2, 1, 1>}, {transform_indices = @transform_2, window_bounds = array<i64: 2, 1, 1>}]} {
    %c0_i32 = arith.constant 0 : i32
    %0 = arith.cmpi eq, %arg1, %c0_i32 : i32
    %1 = arith.extui %0 : i1 to i32
    %c0_i32_0 = arith.constant 0 : i32
    %2 = arith.cmpi ne, %1, %c0_i32_0 : i32
    scf.if %2 {
      %cst_9 = arith.constant 0.000000e+00 : f32
      %12 = vector.broadcast %cst_9 : f32 to vector<2x128xf32>
      %c0_10 = arith.constant 0 : index
      %c0_11 = arith.constant 0 : index
      %13 = vector.load %arg5[%c0_10, %c0_11] : memref<2x128xf32, #tpu.memory_space<vmem>>, vector<2x128xf32>
      tpu.vector_store %arg5[%c0_10, %c0_11], %12 {strides = array<i32>} : memref<2x128xf32, #tpu.memory_space<vmem>>, vector<2x128xf32>,
    } else {
    }
    %c0 = arith.constant 0 : index
    %c0_1 = arith.constant 0 : index
    %c0_2 = arith.constant 0 : index
    %3 = vector.load %arg2[%c0, %c0_1, %c0_2] : memref<2x8x128xf32, #tpu.memory_space<vmem>>, vector<2x8x128xf32>
    %c0_3 = arith.constant 0 : index
    %c0_4 = arith.constant 0 : index
    %4 = vector.load %arg5[%c0_3, %c0_4] : memref<2x128xf32, #tpu.memory_space<vmem>>, vector<2x128xf32>
    %5 = arith.mulf %3, %3 : vector<2x8x128xf32>
    %cst = arith.constant dense<0.000000e+00> : vector<2x128xf32>
    %6 = vector.multi_reduction <add>, %5, %cst [1] : vector<2x8x128xf32> to vector<2x128xf32>
    %7 = arith.addf %4, %6 : vector<2x128xf32>
    %c0_5 = arith.constant 0 : index
    %c0_6 = arith.constant 0 : index
    %8 = vector.load %arg5[%c0_5, %c0_6] : memref<2x128xf32, #tpu.memory_space<vmem>>, vector<2x128xf32>
    tpu.vector_store %arg5[%c0_5, %c0_6], %7 {strides = array<i32>} : memref<2x128xf32, #tpu.memory_space<vmem>>, vector<2x128xf32>,
    %c0_i32_7 = arith.constant 0 : i32
    %9 = arith.cmpi eq, %arg1, %c0_i32_7 : i32
    %10 = arith.extui %9 : i1 to i32
    %c0_i32_8 = arith.constant 0 : i32
    %11 = arith.cmpi ne, %10, %c0_i32_8 : i32
    scf.if %11 {
      %c0_9 = arith.constant 0 : index
      %c0_10 = arith.constant 0 : index
      %12 = vector.load %arg5[%c0_9, %c0_10] : memref<2x128xf32, #tpu.memory_space<vmem>>, vector<2x128xf32>
      %cst_11 = arith.constant dense<0.000000e+00> : vector<2xf32>
      %13 = vector.multi_reduction <add>, %12, %cst_11 [1] : vector<2x128xf32> to vector<2xf32>
      %14 = vector.shape_cast %13 : vector<2xf32> to vector<2x1xf32>
      %15 = vector.shape_cast %14 : vector<2x1xf32> to vector<2x1x1xf32>
      %c0_12 = arith.constant 0 : index
      %c0_13 = arith.constant 0 : index
      %c0_14 = arith.constant 0 : index
      %16 = vector.load %arg3[%c0_12, %c0_13, %c0_14] : memref<2x1x1xf32, #tpu.memory_space<vmem>>, vector<2x1x1xf32>
      %cst_15 = arith.constant 1881.98608 : f32
      %17 = vector.broadcast %cst_15 : f32 to vector<2x1x1xf32>
      %18 = arith.addf %15, %17 : vector<2x1x1xf32>
      %cst_16 = arith.constant -5.000000e-01 : f32
      %19 = vector.broadcast %cst_16 : f32 to vector<2x1x1xf32>
      %20 = arith.mulf %19, %18 : vector<2x1x1xf32>
      %21 = arith.addf %16, %20 : vector<2x1x1xf32>
      %c0_17 = arith.constant 0 : index
      %c0_18 = arith.constant 0 : index
      %c0_19 = arith.constant 0 : index
      %22 = vector.load %arg4[%c0_17, %c0_18, %c0_19] : memref<2x1x1xf32, #tpu.memory_space<vmem>>, vector<2x1x1xf32>
      tpu.vector_store %arg4[%c0_17, %c0_18, %c0_19], %21 {strides = array<i32>} : memref<2x1x1xf32, #tpu.memory_space<vmem>>, vector<2x1x1xf32>,
    } else {
    }
    return
  }
  func.func @transform_0(%arg0: i32, %arg1: i32) -> (i32, i32, i32) {
    %c0_i32 = arith.constant 0 : i32
    %c0_i32_0 = arith.constant 0 : i32
    return %arg0, %arg1, %c0_i32 : i32, i32, i32
  }
  func.func @transform_1(%arg0: i32, %arg1: i32) -> (i32, i32, i32) {
    %c0_i32 = arith.constant 0 : i32
    %c0_i32_0 = arith.constant 0 : i32
    %c0_i32_1 = arith.constant 0 : i32
    return %arg0, %c0_i32, %c0_i32_0 : i32, i32, i32
  }
  func.func @transform_2(%arg0: i32, %arg1: i32) -> (i32, i32, i32) {
    %c0_i32 = arith.constant 0 : i32
    %c0_i32_0 = arith.constant 0 : i32
    %c0_i32_1 = arith.constant 0 : i32
    return %arg0, %c0_i32, %c0_i32_0 : i32, i32, i32
  }
}

</mosaic_0001>

<llo_original>
// kernel: tpu_custom_call.1
$region0: #{tpu_custom_call.1}
  #allocation0 [shape = 'u32[]', space=smem, size = 0x4, offset = 0x4, fixed_abs, tag = 'smem constant byte address 0x4 - core index']
  #allocation1 [shape = 'u32[144,128]{1,0:T(1,128)}', space=vmem, size = 0x12000, scoped, tag = 'internal scratch']
  #allocation2 [shape = 'f32[2,128]{1,0:T(2,128)}', space=vmem, size = 0x400, scoped, tag = 'scratch operand']
  %s0 = inlined_call_operand.hbm [shape: f32[2,8,128], index: 0, kind: input, shape index: {}]
  %s1 = inlined_call_operand.vmem [shape: f32[2,1,1], index: 1, kind: input, shape index: {}]
  %s2 = inlined_call_operand.vmem [shape: f32[2,1,1], index: 2, kind: output, shape index: {}]
  %s3 = sld [smem:[#allocation0]]
  $region30: #{tpu_custom_call.1} parent=0
    _
  %s5 = ssub.s32 1, %s3
  %s6 = scalar_select 0, %s5, %s3
  $region1: #{tpu_custom_call.1} parent=0
    #allocation3 [shape = 'u8[8192]{0}', space=vmem, size = 0x2000, scoped, tag = 'input window, operand 0, single buffered']
    #allocation4 [shape = 's32[1]{0}', space=sflag, size = 0x4, scoped, tag = 'scoped memory for tpu_custom_call.1']
    %7 = vsyncpa [#allocation4], 0
    // Predicated region
    $region2: #{tpu_custom_call.1} parent=1 // pred_check
      _
    $region3: #{tpu_custom_call.1} parent=1 // pred_check_branch
      %9 = sbr.rel (0) target = $region5
    $region4: #{tpu_custom_call.1} parent=1 // pred_region
      %s11 = ssub.s32 256, 256
      %12 = vsyncadd [#allocation4], %s11
      %s13 = sshll.u32 [#allocation3], 4
      %s14 = int_to_ptr.vmem [resolvable:$true] %s13
      %19 = dma.hbm_to_vmem [thread:$0]  %s0, 256, %s14, [#allocation4], 128, 128, 8
    $region5: #{tpu_custom_call.1} parent=1 // pred_fallthru
      _
    // Predicated region
    $region6: #{tpu_custom_call.1} parent=1 // pred_check
      _
    $region7: #{tpu_custom_call.1} parent=1 // pred_check_branch
      %21 = sbr.rel (0) target = $region9
    $region8: #{tpu_custom_call.1} parent=1 // pred_region
      _
    $region9: #{tpu_custom_call.1} parent=1 // pred_fallthru
      _
    // Predicated region
    $region10: #{tpu_custom_call.1} parent=1 // pred_check
      _
    $region11: #{tpu_custom_call.1} parent=1 // pred_check_branch
      %23 = sbr.rel (0) target = $region13
    $region12: #{tpu_custom_call.1} parent=1 // pred_region
      %24 = dma.done [#allocation4], 256
    $region13: #{tpu_custom_call.1} parent=1 // pred_fallthru
      _
    %p25 = scmp.eq.s32.totalorder 0, 0
    // Predicated region
    $region14: #{tpu_custom_call.1} parent=1 // pred_check
      %p26 = pneg %p25
    $region15: #{tpu_custom_call.1} parent=1 // pred_check_branch
      %28 = sbr.rel (%p26) target = $region17
    $region16: #{tpu_custom_call.1} parent=1 // pred_region
      %29 = vst [vmem:[#allocation2] sm:$0x3] 0.0
    $region17: #{tpu_custom_call.1} parent=1 // pred_fallthru
      _
    %v30 = vld [vmem:[#allocation3] sm:$0xff]
    %v31 = vld [vmem:[#allocation3 + $0x8] sm:$0xff]
    %v32 = vld [vmem:[#allocation2] sm:$0x3]
    %v33 = vmul.f32 %v30, %v30
    %v34 = vmul.f32 %v31, %v31
    %v35 = vrot.slane %v33, 4
    %v36 = vadd.f32 %v33, %v35
    %v37 = vrot.slane %v36, 2
    %v38 = vadd.f32 %v36, %v37
    %v39 = vrot.slane %v38, 1
    %v40 = vadd.f32 %v38, %v39
    %v41 = vrot.slane %v34, 4
    %v42 = vadd.f32 %v34, %v41
    %v43 = vrot.slane %v42, 2
    %v44 = vadd.f32 %v42, %v43
    %v45 = vrot.slane %v44, 1
    %v46 = vadd.f32 %v44, %v45
    %vm49 = vcmask 1041409
    %v50 = vsel %vm49, %v46, %v40
    %v52 = vadd.f32 %v32, %v50
    %53 = vst [vmem:[#allocation2] sm:$0x3] %v52
    // Predicated region
    $region18: #{tpu_custom_call.1} parent=1 // pred_check
      %p54 = pneg %p25
    $region19: #{tpu_custom_call.1} parent=1 // pred_check_branch
      %56 = sbr.rel (%p54) target = $region21
    $region20: #{tpu_custom_call.1} parent=1 // pred_region
      %v57 = vld [vmem:[#allocation2] sm:$0x3]
      %vm58 = vcmask 1041408
      %v59 = vsel %vm58, %v57, 0.0
      %60 = vadd.xlane.f32.xlu0 %v59
      %v61 = vpop.xlane.xlu0 %60
      %v63 = vlaneseq
      %v64 = vshrl.u32 %v63, 7
      %v65 = vsub.s32 0, %v64
      %v66 = vrot.slane %v61, %v65
      %v67 = vlaneseq
      %v68 = vshrl.u32 %v67, 7
      %v69 = vsub.s32 1, %v68
      %v70 = vrot.slane %v61, %v69
      %v73 = vld [vmem:[%s1] sm:$0x1]
      %v74 = vld [vmem:[%s1 + $0x1] sm:$0x1]
      %v75 = vadd.f32 %v66, 1881.9861
      %v76 = vadd.f32 %v70, 1881.9861
      %v77 = vmul.f32 %v75, -0.5
      %v78 = vmul.f32 %v76, -0.5
      %v79 = vadd.f32 %v73, %v77
      %v80 = vadd.f32 %v74, %v78
      %vm81 = vcmask 0
      %82 = vst.msk [vmem:[%s2] sm:$0x1] %vm81, %v79
      %83 = vst.msk [vmem:[%s2 + $0x1] sm:$0x1] %vm81, %v80
    $region21: #{tpu_custom_call.1} parent=1 // pred_fallthru
      _
    // Predicated region
    $region22: #{tpu_custom_call.1} parent=1 // pred_check
      _
    $region23: #{tpu_custom_call.1} parent=1 // pred_check_branch
      %85 = sbr.rel (0) target = $region25
    $region24: #{tpu_custom_call.1} parent=1 // pred_region
      _
    $region25: #{tpu_custom_call.1} parent=1 // pred_fallthru
      _
    // Predicated region
    $region26: #{tpu_custom_call.1} parent=1 // pred_check
      _
    $region27: #{tpu_custom_call.1} parent=1 // pred_check_branch
      %87 = sbr.rel (0) target = $region29
    $region28: #{tpu_custom_call.1} parent=1 // pred_region
      _
    $region29: #{tpu_custom_call.1} parent=1 // pred_fallthru
      _
    %88 = vsyncpa [#allocation4], 1

</llo_original>
